<compile_context>
chip_gen: v7x
topology: tpu7x:2x2x1
jax: 0.10.0
libtpu: 0.0.40
codegen_flags: <defaults>
</compile_context>

<pallas_src>
import jax
import jax.numpy as jnp
from jax.experimental import pallas as pl
from jax.experimental.pallas import tpu as pltpu

_MIB = 1024 * 1024


def _add_one_kernel(x_ref, o_ref):
    # Elementwise hot path: whole VMEM tile through the VPU.
    o_ref[...] = x_ref[...] + jnp.asarray(1, dtype=x_ref.dtype)


def _hw_budgets():
    """(target_tile_bytes, vmem_limit_bytes) derived from the chip's VMEM capacity."""
    vmem_capacity = 64 * _MIB  # conservative default (v7x per-TC VMEM)
    try:
        info = pltpu.get_tpu_info()
        cap = getattr(info, "vmem_capacity_bytes", None)
        if cap:
            vmem_capacity = int(cap)
    except Exception:
        pass
    # ~8 MiB tiles everywhere: peak = 2 arrays x 2 pipeline buffers x tile = 32 MiB.
    target_tile = min(8 * _MIB, max(2 * _MIB, vmem_capacity // 8))
    # Explicit scoped-VMEM limit (default 16 MiB on v5e / 32 MiB on v6e,v7x is too low
    # for 8 MiB tiles): 4 buffers + headroom, capped at 3/4 of physical VMEM.
    vmem_limit = min(4 * target_tile + 8 * _MIB, (vmem_capacity * 3) // 4)
    return int(target_tile), int(vmem_limit)


def _is_multi_tensorcore() -> bool:
    """True on chips whose grid 'parallel' axes shard across 2 TensorCores (v7x)."""
    try:
        kind = jax.devices()[0].device_kind.lower()
    except Exception:
        return False
    return ("v7" in kind) or ("7x" in kind)


def _pick_block_rows(rows, row_bytes, min_rows, target_bytes, multi_tc):
    """Leading-dim block size: ~target_bytes tiles, sublane-packed, divisor-preferring."""
    if rows <= min_rows:
        # Full (small) leading extent -- full-array-dim exception to the (8,128) rule.
        return rows

    total_bytes = rows * row_bytes
    # On multi-TC chips keep >= 4 balanced grid steps for large arrays so both
    # TensorCores stream HBM; skip forcing on small arrays / single-TC chips.
    force_split = multi_tc and total_bytes >= 4 * _MIB

    if total_bytes <= target_bytes and not force_split:
        return rows  # single full-array block: one step, no masked tail

    max_block = (target_bytes // row_bytes) // min_rows * min_rows
    max_block = max(min_rows, min(max_block, (rows // min_rows) * min_rows))
    if force_split:
        cap = max(min_rows, (rows // 4) // min_rows * min_rows)
        max_block = min(max_block, cap)

    # Prefer a block that divides rows evenly (no ragged tail -> no masked
    # writeback / wasted tail DMA); only search down to ~half the byte target.
    search_floor = max(min_rows, (max_block // 2) // min_rows * min_rows)
    fallback_divisor = None
    b = max_block
    while b >= search_floor:
        if rows % b == 0:
            steps = rows // b
            if (not force_split) or steps % 2 == 0:
                return b
            if fallback_divisor is None:
                fallback_divisor = b
        b -= min_rows
    if fallback_divisor is not None:
        return fallback_divisor
    return max_block  # ragged tail; Pallas masks only the last block


def g_module_forward(x: jax.Array) -> jax.Array:
    """Pallas implementation of G_Moudle.forward: output = input + 1."""
    orig_shape = x.shape
    n = x.size
    if n == 0:
        return x + jnp.asarray(1, x.dtype)

    itemsize = jnp.dtype(x.dtype).itemsize
    target_bytes, vmem_limit = _hw_budgets()
    multi_tc = _is_multi_tensorcore()

    compiler_params = pltpu.CompilerParams(
        dimension_semantics=("parallel",),
        vmem_limit_bytes=vmem_limit,
    )
    cost = pl.CostEstimate(
        flops=n, transcendentals=0, bytes_accessed=2 * n * itemsize
    )

    lane = 128
    # Packed sublane multiple: 8 rows f32, 16 bf16, 32 int8/fp8.
    min_rows = max(8, 32 // max(itemsize, 1))

    if n % lane == 0:
        # Lane-dense fast path: contiguous (rows, 128) slab, unmasked 128-lane stores.
        rows = n // lane
        x_view = x.reshape(rows, lane)  # contiguous reshape: no data movement
        row_bytes = lane * itemsize
        block_rows = _pick_block_rows(rows, row_bytes, min_rows, target_bytes, multi_tc)
        grid = (pl.cdiv(rows, block_rows),)
        in_spec = pl.BlockSpec((block_rows, lane), lambda i: (i, 0))
        out_spec = pl.BlockSpec((block_rows, lane), lambda i: (i, 0))
        out_shape = jax.ShapeDtypeStruct((rows, lane), x.dtype)
    else:
        # Unaligned fallback: flat 1D view with a block that is a multiple of
        # (packed-sublanes x 128) elements; only the final ragged block is masked.
        x_view = x.reshape(n)
        min_elems = min_rows * lane  # 1024 f32 / 2048 bf16 / 4096 int8
        if n <= min_elems or n * itemsize <= target_bytes:
            block_elems = n  # single full-array block (full-dim exception)
        else:
            block_elems = (target_bytes // itemsize) // min_elems * min_elems
            block_elems = max(min_elems, min(block_elems, (n // min_elems) * min_elems))
            if multi_tc and n * itemsize >= 4 * _MIB:
                cap = max(min_elems, (n // 4) // min_elems * min_elems)
                block_elems = min(block_elems, cap)
        grid = (pl.cdiv(n, block_elems),)
        in_spec = pl.BlockSpec((block_elems,), lambda i: (i,))
        out_spec = pl.BlockSpec((block_elems,), lambda i: (i,))
        out_shape = jax.ShapeDtypeStruct((n,), x.dtype)

    out = pl.pallas_call(
        _add_one_kernel,
        out_shape=out_shape,
        grid=grid,
        in_specs=[in_spec],
        out_specs=out_spec,
        compiler_params=compiler_params,
        cost_estimate=cost,
    )(x_view)

    return out.reshape(orig_shape)


if __name__ == "__main__":
    key = jax.random.PRNGKey(0)
    # NCHW input consistent with a generic conv-style module input.
    x = jax.random.normal(key, (2, 4, 16, 16), dtype=jnp.float32)

    out = jax.block_until_ready(g_module_forward(x))
    expected = x + 1.0
    assert out.shape == x.shape and out.dtype == x.dtype
    assert jnp.allclose(out, expected, atol=1e-6, rtol=1e-6)

    # Exercise the non-128-multiple fallback path as well.
    y = jax.random.normal(jax.random.PRNGKey(1), (3, 5, 7), dtype=jnp.float32)
    out_y = jax.block_until_ready(g_module_forward(y))
    assert out_y.shape == y.shape and out_y.dtype == y.dtype
    assert jnp.allclose(out_y, y + 1.0, atol=1e-6, rtol=1e-6)

    print("KERNEL_OK")
</pallas_src>

<mosaic_0001>
module attributes {stable_mosaic.version = 11 : i64} {
  func.func @_add_one_kernel(%arg0: i32, %arg1: memref<16x128xf32, #tpu.memory_space<vmem>>, %arg2: memref<16x128xf32, #tpu.memory_space<vmem>>) attributes {dimension_semantics = [#tpu.dimension_semantics<parallel>], iteration_bounds = array<i64: 1>, scalar_prefetch = 0 : i64, scratch_operands = 0 : i64, tpu.core_type = #tpu.core_type<tc>, window_params = [{transform_indices = @transform_0, window_bounds = array<i64: 16, 128>}, {transform_indices = @transform_1, window_bounds = array<i64: 16, 128>}]} {
    %c0 = arith.constant 0 : index
    %c0_0 = arith.constant 0 : index
    %0 = vector.load %arg1[%c0, %c0_0] : memref<16x128xf32, #tpu.memory_space<vmem>>, vector<16x128xf32>
    %cst = arith.constant 1.000000e+00 : f32
    %1 = vector.broadcast %cst : f32 to vector<16x128xf32>
    %2 = arith.addf %0, %1 : vector<16x128xf32>
    %c0_1 = arith.constant 0 : index
    %c0_2 = arith.constant 0 : index
    %3 = vector.load %arg2[%c0_1, %c0_2] : memref<16x128xf32, #tpu.memory_space<vmem>>, vector<16x128xf32>
    tpu.vector_store %arg2[%c0_1, %c0_2], %2 {strides = array<i32>} : memref<16x128xf32, #tpu.memory_space<vmem>>, vector<16x128xf32>,
    return
  }
  func.func @transform_0(%arg0: i32) -> (i32, i32) {
    %c0_i32 = arith.constant 0 : i32
    %c0_i32_0 = arith.constant 0 : i32
    return %arg0, %c0_i32 : i32, i32
  }
  func.func @transform_1(%arg0: i32) -> (i32, i32) {
    %c0_i32 = arith.constant 0 : i32
    %c0_i32_0 = arith.constant 0 : i32
    return %arg0, %c0_i32 : i32, i32
  }
}

</mosaic_0001>

<llo_original>
// kernel: tpu_custom_call.1
$region0: #{tpu_custom_call.1}
  #allocation0 [shape = 'u32[]', space=smem, size = 0x4, offset = 0x4, fixed_abs, tag = 'smem constant byte address 0x4 - core index']
  #allocation1 [shape = 'u32[144,128]{1,0:T(1,128)}', space=vmem, size = 0x12000, scoped, tag = 'internal scratch']
  %s0 = inlined_call_operand.hbm [shape: f32[16,128], index: 0, kind: input, shape index: {}]
  %s1 = inlined_call_operand.hbm [shape: f32[16,128], index: 1, kind: output, shape index: {}]
  %s2 = sld [smem:[#allocation0]]
  $region18: #{tpu_custom_call.1} parent=0
    _
  %s4 = ssub.s32 1, %s2
  %s5 = scalar_select 0, %s4, %s2
  $region1: #{tpu_custom_call.1} parent=0
    #allocation2 [shape = 'u8[8192]{0}', space=vmem, size = 0x2000, scoped, tag = 'input window, operand 0, single buffered']
    #allocation3 [shape = 's32[1]{0}', space=sflag, size = 0x4, scoped, tag = 'scoped memory for tpu_custom_call.1']
    #allocation4 [shape = 's32[1]{0}', space=sflag, size = 0x4, scoped, tag = 'scoped memory for tpu_custom_call.1']
    #allocation5 [shape = 'u8[8192]{0}', space=vmem, size = 0x2000, scoped, tag = 'output window, operand 0, single buffered']
    %6 = vsyncpa [#allocation3], 0
    %7 = vsyncpa [#allocation4], 0
    // Predicated region
    $region2: #{tpu_custom_call.1} parent=1 // pred_check
      _
    $region3: #{tpu_custom_call.1} parent=1 // pred_check_branch
      %9 = sbr.rel (0) target = $region5
    $region4: #{tpu_custom_call.1} parent=1 // pred_region
      %s11 = ssub.s32 256, 256
      %12 = vsyncadd [#allocation3], %s11
      %s13 = sshll.u32 [#allocation2], 4
      %s14 = int_to_ptr.vmem [resolvable:$true] %s13
      %19 = dma.hbm_to_vmem [thread:$0]  %s0, 256, %s14, [#allocation3], 128, 128, 8
    $region5: #{tpu_custom_call.1} parent=1 // pred_fallthru
      _
    // Predicated region
    $region6: #{tpu_custom_call.1} parent=1 // pred_check
      _
    $region7: #{tpu_custom_call.1} parent=1 // pred_check_branch
      %21 = sbr.rel (0) target = $region9
    $region8: #{tpu_custom_call.1} parent=1 // pred_region
      %22 = dma.done [#allocation3], 256
    $region9: #{tpu_custom_call.1} parent=1 // pred_fallthru
      _
    %v23 = vld [vmem:[#allocation2] sm:$0xff]
    %v24 = vld [vmem:[#allocation2 + $0x8] sm:$0xff]
    %v25 = vadd.f32 %v23, 1.0
    %v26 = vadd.f32 %v24, 1.0
    %27 = vst [vmem:[#allocation5] sm:$0xff] %v25
    %28 = vst [vmem:[#allocation5 + $0x8] sm:$0xff] %v26
    // Predicated region
    $region10: #{tpu_custom_call.1} parent=1 // pred_check
      _
    $region11: #{tpu_custom_call.1} parent=1 // pred_check_branch
      %30 = sbr.rel (0) target = $region13
    $region12: #{tpu_custom_call.1} parent=1 // pred_region
      %s32 = ssub.s32 256, 256
      %33 = vsyncadd [#allocation4], %s32
      %s34 = sshll.u32 [#allocation5], 4
      %s35 = int_to_ptr.vmem [resolvable:$true] %s34
      %40 = dma.vmem_to_hbm [thread:$0]  %s35, 256, %s1, [#allocation4], 128, 128, 8
    $region13: #{tpu_custom_call.1} parent=1 // pred_fallthru
      _
    // Predicated region
    $region14: #{tpu_custom_call.1} parent=1 // pred_check
      _
    $region15: #{tpu_custom_call.1} parent=1 // pred_check_branch
      %42 = sbr.rel (0) target = $region17
    $region16: #{tpu_custom_call.1} parent=1 // pred_region
      %43 = dma.done [#allocation4], 256
    $region17: #{tpu_custom_call.1} parent=1 // pred_fallthru
      _
    %44 = vsyncpa [#allocation3], 1
    %45 = vsyncpa [#allocation4], 1

</llo_original>
